<compile_context>
chip_gen: v7x
topology: tpu7x:2x2x1
jax: 0.10.0
libtpu: 0.0.40
codegen_flags: <defaults>
</compile_context>

<pallas_src>
import jax
import jax.numpy as jnp
from jax.experimental import pallas as pl
from jax.experimental.pallas import tpu as pltpu


def _round_up(x, m):
    return ((x + m - 1) // m) * m


def takagi_sugeno_kernel(th_ref, f_ref, x_ref, o_ref):
    # th_ref : SMEM (R*(I+1)*O,) f32     -- flattened theta, read as scalars
    # f_ref  : VMEM (R, Mt)              -- rule firing strengths, lane-dense
    # x_ref  : VMEM (I, Mt)              -- raw inputs (no bias column), lane-dense
    # o_ref  : VMEM (O, Mt) f32          -- outputs, lane-dense
    R = f_ref.shape[0]
    I = x_ref.shape[0]
    O = o_ref.shape[0]
    Ip1 = I + 1

    # Hoist row loads (each is a (1, Mt) vreg-friendly slab).
    xs = [x_ref[i:i + 1, :].astype(jnp.float32) for i in range(I)]
    fs = [f_ref[r:r + 1, :].astype(jnp.float32) for r in range(R)]

    # out^T[o, :] = sum_r f_r * ( sum_i theta[r,i,o] * x_i + theta[r,I,o] )
    # All theta values are SMEM scalars -> pure VPU scalar-broadcast FMAs.
    for o in range(O):
        acc = None
        for r in range(R):
            w = th_ref[(r * Ip1 + I) * O + o]          # bias term (theta's last row)
            for i in range(I):
                w = w + th_ref[(r * Ip1 + i) * O + o] * xs[i]
            term = fs[r] * w
            acc = term if acc is None else acc + term
        o_ref[o:o + 1, :] = acc


def takagi_sugeno_forward(f, X, theta, *, max_tile=8192):
    """f: (B,S,R), X: (B,S,I), theta: (R, I+1, O) -> (B,S,O) float32."""
    B, S, R = f.shape
    I = X.shape[-1]
    O = theta.shape[-1]
    M = B * S

    # Lane-dense tiling over the flattened row dimension.
    tile_m = min(max_tile, _round_up(M, 128))
    m_pad = _round_up(M, tile_m)
    grid_m = m_pad // tile_m

    # Cheap layout plumbing in XLA: transpose so M is the last (lane) axis.
    f_t = jnp.swapaxes(f.reshape(M, R), 0, 1)          # (R, M)
    x_t = jnp.swapaxes(X.reshape(M, I), 0, 1)          # (I, M)
    pad = m_pad - M
    if pad:
        f_t = jnp.pad(f_t, ((0, 0), (0, pad)))
        x_t = jnp.pad(x_t, ((0, 0), (0, pad)))

    theta_flat = theta.astype(jnp.float32).reshape(-1)  # (R*(I+1)*O,) -> SMEM

    out_t = pl.pallas_call(
        takagi_sugeno_kernel,
        out_shape=jax.ShapeDtypeStruct((O, m_pad), jnp.float32),
        grid_spec=pltpu.PrefetchScalarGridSpec(
            num_scalar_prefetch=0,
            grid=(grid_m,),
            in_specs=[
                # Tiny coefficient table: whole array in SMEM, scalar reads.
                pl.BlockSpec(memory_space=pltpu.MemorySpace.SMEM),
                pl.BlockSpec((R, tile_m), lambda m: (0, m)),
                pl.BlockSpec((I, tile_m), lambda m: (0, m)),
            ],
            out_specs=pl.BlockSpec((O, tile_m), lambda m: (0, m)),
        ),
        compiler_params=pltpu.CompilerParams(
            dimension_semantics=("parallel",)),
    )(theta_flat, f_t, x_t)

    out = jnp.swapaxes(out_t[:, :M], 0, 1).reshape(B, S, O)
    return out


def takagi_sugeno_reference(f, X, theta):
    """Pure-JAX replica of the PyTorch forward for verification."""
    B, S, R = f.shape
    I = X.shape[-1]
    O = theta.shape[-1]
    ones = jnp.ones(X.shape[:-1] + (1,), dtype=X.dtype)
    Xaug = jnp.concatenate([X, ones], axis=-1)
    Z = jnp.einsum('bsr,bsi->bsri', f, Xaug).reshape(B, S, R * (I + 1))
    theta2d = theta.reshape(R * (I + 1), O)
    return jnp.einsum('bij,jk->bik', Z.astype(jnp.float32), theta2d.astype(jnp.float32))


if __name__ == "__main__":
    # Small, deterministic example shapes consistent with the module:
    B, S = 2, 8            # batch, sequence rows
    num_inputs = 4         # -> I
    num_rules = 3          # -> R  (firing strengths)
    num_outputs = 2        # -> O

    key = jax.random.PRNGKey(0)
    kf, kx = jax.random.split(key)
    f = jax.random.uniform(kf, (B, S, num_rules), dtype=jnp.float32)
    X = jax.random.normal(kx, (B, S, num_inputs), dtype=jnp.float32)

    # Deterministic synthetic theta: one (R*(I+1), 1) column per output, stacked.
    Ip1 = num_inputs + 1
    theta = (jnp.arange(num_rules * Ip1 * num_outputs, dtype=jnp.float32)
             .reshape(num_rules, Ip1, num_outputs) * 0.01 - 0.05)

    out = takagi_sugeno_forward(f, X, theta)
    out = jax.block_until_ready(out)

    ref = takagi_sugeno_reference(f, X, theta)
    assert out.shape == (B, S, num_outputs)
    assert jnp.allclose(out, ref, atol=1e-5, rtol=1e-5), "mismatch vs reference"

    print("KERNEL_OK")
</pallas_src>

<mosaic_0001>
module attributes {stable_mosaic.version = 11 : i64} {
  func.func @takagi_sugeno_kernel(%arg0: i32, %arg1: memref<30xf32, #tpu.memory_space<smem>>, %arg2: memref<3x128xf32, #tpu.memory_space<vmem>>, %arg3: memref<4x128xf32, #tpu.memory_space<vmem>>, %arg4: memref<2x128xf32, #tpu.memory_space<vmem>>) attributes {dimension_semantics = [#tpu.dimension_semantics<parallel>], iteration_bounds = array<i64: 1>, scalar_prefetch = 0 : i64, scratch_operands = 0 : i64, tpu.core_type = #tpu.core_type<tc>, window_params = [{transform_indices = @transform_0, window_bounds = array<i64: 30>}, {transform_indices = @transform_1, window_bounds = array<i64: 3, 128>}, {transform_indices = @transform_2, window_bounds = array<i64: 4, 128>}, {transform_indices = @transform_3, window_bounds = array<i64: 2, 128>}]} {
    %c0 = arith.constant 0 : index
    %c0_0 = arith.constant 0 : index
    %0 = vector.load %arg3[%c0, %c0_0] : memref<4x128xf32, #tpu.memory_space<vmem>>, vector<1x128xf32>
    %c1 = arith.constant 1 : index
    %c0_1 = arith.constant 0 : index
    %1 = vector.load %arg3[%c1, %c0_1] : memref<4x128xf32, #tpu.memory_space<vmem>>, vector<1x128xf32>
    %c2 = arith.constant 2 : index
    %c0_2 = arith.constant 0 : index
    %2 = vector.load %arg3[%c2, %c0_2] : memref<4x128xf32, #tpu.memory_space<vmem>>, vector<1x128xf32>
    %c3 = arith.constant 3 : index
    %c0_3 = arith.constant 0 : index
    %3 = vector.load %arg3[%c3, %c0_3] : memref<4x128xf32, #tpu.memory_space<vmem>>, vector<1x128xf32>
    %c0_4 = arith.constant 0 : index
    %c0_5 = arith.constant 0 : index
    %4 = vector.load %arg2[%c0_4, %c0_5] : memref<3x128xf32, #tpu.memory_space<vmem>>, vector<1x128xf32>
    %c1_6 = arith.constant 1 : index
    %c0_7 = arith.constant 0 : index
    %5 = vector.load %arg2[%c1_6, %c0_7] : memref<3x128xf32, #tpu.memory_space<vmem>>, vector<1x128xf32>
    %c2_8 = arith.constant 2 : index
    %c0_9 = arith.constant 0 : index
    %6 = vector.load %arg2[%c2_8, %c0_9] : memref<3x128xf32, #tpu.memory_space<vmem>>, vector<1x128xf32>
    %c8 = arith.constant 8 : index
    %7 = memref.load %arg1[%c8] : memref<30xf32, #tpu.memory_space<smem>>
    %c0_10 = arith.constant 0 : index
    %8 = memref.load %arg1[%c0_10] : memref<30xf32, #tpu.memory_space<smem>>
    %9 = vector.broadcast %8 : f32 to vector<1x128xf32>
    %10 = arith.mulf %9, %0 : vector<1x128xf32>
    %11 = vector.broadcast %7 : f32 to vector<1x128xf32>
    %12 = arith.addf %11, %10 : vector<1x128xf32>
    %c2_11 = arith.constant 2 : index
    %13 = memref.load %arg1[%c2_11] : memref<30xf32, #tpu.memory_space<smem>>
    %14 = vector.broadcast %13 : f32 to vector<1x128xf32>
    %15 = arith.mulf %14, %1 : vector<1x128xf32>
    %16 = arith.addf %12, %15 : vector<1x128xf32>
    %c4 = arith.constant 4 : index
    %17 = memref.load %arg1[%c4] : memref<30xf32, #tpu.memory_space<smem>>
    %18 = vector.broadcast %17 : f32 to vector<1x128xf32>
    %19 = arith.mulf %18, %2 : vector<1x128xf32>
    %20 = arith.addf %16, %19 : vector<1x128xf32>
    %c6 = arith.constant 6 : index
    %21 = memref.load %arg1[%c6] : memref<30xf32, #tpu.memory_space<smem>>
    %22 = vector.broadcast %21 : f32 to vector<1x128xf32>
    %23 = arith.mulf %22, %3 : vector<1x128xf32>
    %24 = arith.addf %20, %23 : vector<1x128xf32>
    %25 = arith.mulf %4, %24 : vector<1x128xf32>
    %c18 = arith.constant 18 : index
    %26 = memref.load %arg1[%c18] : memref<30xf32, #tpu.memory_space<smem>>
    %c10 = arith.constant 10 : index
    %27 = memref.load %arg1[%c10] : memref<30xf32, #tpu.memory_space<smem>>
    %28 = vector.broadcast %27 : f32 to vector<1x128xf32>
    %29 = arith.mulf %28, %0 : vector<1x128xf32>
    %30 = vector.broadcast %26 : f32 to vector<1x128xf32>
    %31 = arith.addf %30, %29 : vector<1x128xf32>
    %c12 = arith.constant 12 : index
    %32 = memref.load %arg1[%c12] : memref<30xf32, #tpu.memory_space<smem>>
    %33 = vector.broadcast %32 : f32 to vector<1x128xf32>
    %34 = arith.mulf %33, %1 : vector<1x128xf32>
    %35 = arith.addf %31, %34 : vector<1x128xf32>
    %c14 = arith.constant 14 : index
    %36 = memref.load %arg1[%c14] : memref<30xf32, #tpu.memory_space<smem>>
    %37 = vector.broadcast %36 : f32 to vector<1x128xf32>
    %38 = arith.mulf %37, %2 : vector<1x128xf32>
    %39 = arith.addf %35, %38 : vector<1x128xf32>
    %c16 = arith.constant 16 : index
    %40 = memref.load %arg1[%c16] : memref<30xf32, #tpu.memory_space<smem>>
    %41 = vector.broadcast %40 : f32 to vector<1x128xf32>
    %42 = arith.mulf %41, %3 : vector<1x128xf32>
    %43 = arith.addf %39, %42 : vector<1x128xf32>
    %44 = arith.mulf %5, %43 : vector<1x128xf32>
    %45 = arith.addf %25, %44 : vector<1x128xf32>
    %c28 = arith.constant 28 : index
    %46 = memref.load %arg1[%c28] : memref<30xf32, #tpu.memory_space<smem>>
    %c20 = arith.constant 20 : index
    %47 = memref.load %arg1[%c20] : memref<30xf32, #tpu.memory_space<smem>>
    %48 = vector.broadcast %47 : f32 to vector<1x128xf32>
    %49 = arith.mulf %48, %0 : vector<1x128xf32>
    %50 = vector.broadcast %46 : f32 to vector<1x128xf32>
    %51 = arith.addf %50, %49 : vector<1x128xf32>
    %c22 = arith.constant 22 : index
    %52 = memref.load %arg1[%c22] : memref<30xf32, #tpu.memory_space<smem>>
    %53 = vector.broadcast %52 : f32 to vector<1x128xf32>
    %54 = arith.mulf %53, %1 : vector<1x128xf32>
    %55 = arith.addf %51, %54 : vector<1x128xf32>
    %c24 = arith.constant 24 : index
    %56 = memref.load %arg1[%c24] : memref<30xf32, #tpu.memory_space<smem>>
    %57 = vector.broadcast %56 : f32 to vector<1x128xf32>
    %58 = arith.mulf %57, %2 : vector<1x128xf32>
    %59 = arith.addf %55, %58 : vector<1x128xf32>
    %c26 = arith.constant 26 : index
    %60 = memref.load %arg1[%c26] : memref<30xf32, #tpu.memory_space<smem>>
    %61 = vector.broadcast %60 : f32 to vector<1x128xf32>
    %62 = arith.mulf %61, %3 : vector<1x128xf32>
    %63 = arith.addf %59, %62 : vector<1x128xf32>
    %64 = arith.mulf %6, %63 : vector<1x128xf32>
    %65 = arith.addf %45, %64 : vector<1x128xf32>
    %c0_12 = arith.constant 0 : index
    %c0_13 = arith.constant 0 : index
    %66 = vector.load %arg4[%c0_12, %c0_13] : memref<2x128xf32, #tpu.memory_space<vmem>>, vector<1x128xf32>
    tpu.vector_store %arg4[%c0_12, %c0_13], %65 {strides = array<i32>} : memref<2x128xf32, #tpu.memory_space<vmem>>, vector<1x128xf32>,
    %c9 = arith.constant 9 : index
    %67 = memref.load %arg1[%c9] : memref<30xf32, #tpu.memory_space<smem>>
    %c1_14 = arith.constant 1 : index
    %68 = memref.load %arg1[%c1_14] : memref<30xf32, #tpu.memory_space<smem>>
    %69 = vector.broadcast %68 : f32 to vector<1x128xf32>
    %70 = arith.mulf %69, %0 : vector<1x128xf32>
    %71 = vector.broadcast %67 : f32 to vector<1x128xf32>
    %72 = arith.addf %71, %70 : vector<1x128xf32>
    %c3_15 = arith.constant 3 : index
    %73 = memref.load %arg1[%c3_15] : memref<30xf32, #tpu.memory_space<smem>>
    %74 = vector.broadcast %73 : f32 to vector<1x128xf32>
    %75 = arith.mulf %74, %1 : vector<1x128xf32>
    %76 = arith.addf %72, %75 : vector<1x128xf32>
    %c5 = arith.constant 5 : index
    %77 = memref.load %arg1[%c5] : memref<30xf32, #tpu.memory_space<smem>>
    %78 = vector.broadcast %77 : f32 to vector<1x128xf32>
    %79 = arith.mulf %78, %2 : vector<1x128xf32>
    %80 = arith.addf %76, %79 : vector<1x128xf32>
    %c7 = arith.constant 7 : index
    %81 = memref.load %arg1[%c7] : memref<30xf32, #tpu.memory_space<smem>>
    %82 = vector.broadcast %81 : f32 to vector<1x128xf32>
    %83 = arith.mulf %82, %3 : vector<1x128xf32>
    %84 = arith.addf %80, %83 : vector<1x128xf32>
    %85 = arith.mulf %4, %84 : vector<1x128xf32>
    %c19 = arith.constant 19 : index
    %86 = memref.load %arg1[%c19] : memref<30xf32, #tpu.memory_space<smem>>
    %c11 = arith.constant 11 : index
    %87 = memref.load %arg1[%c11] : memref<30xf32, #tpu.memory_space<smem>>
    %88 = vector.broadcast %87 : f32 to vector<1x128xf32>
    %89 = arith.mulf %88, %0 : vector<1x128xf32>
    %90 = vector.broadcast %86 : f32 to vector<1x128xf32>
    %91 = arith.addf %90, %89 : vector<1x128xf32>
    %c13 = arith.constant 13 : index
    %92 = memref.load %arg1[%c13] : memref<30xf32, #tpu.memory_space<smem>>
    %93 = vector.broadcast %92 : f32 to vector<1x128xf32>
    %94 = arith.mulf %93, %1 : vector<1x128xf32>
    %95 = arith.addf %91, %94 : vector<1x128xf32>
    %c15 = arith.constant 15 : index
    %96 = memref.load %arg1[%c15] : memref<30xf32, #tpu.memory_space<smem>>
    %97 = vector.broadcast %96 : f32 to vector<1x128xf32>
    %98 = arith.mulf %97, %2 : vector<1x128xf32>
    %99 = arith.addf %95, %98 : vector<1x128xf32>
    %c17 = arith.constant 17 : index
    %100 = memref.load %arg1[%c17] : memref<30xf32, #tpu.memory_space<smem>>
    %101 = vector.broadcast %100 : f32 to vector<1x128xf32>
    %102 = arith.mulf %101, %3 : vector<1x128xf32>
    %103 = arith.addf %99, %102 : vector<1x128xf32>
    %104 = arith.mulf %5, %103 : vector<1x128xf32>
    %105 = arith.addf %85, %104 : vector<1x128xf32>
    %c29 = arith.constant 29 : index
    %106 = memref.load %arg1[%c29] : memref<30xf32, #tpu.memory_space<smem>>
    %c21 = arith.constant 21 : index
    %107 = memref.load %arg1[%c21] : memref<30xf32, #tpu.memory_space<smem>>
    %108 = vector.broadcast %107 : f32 to vector<1x128xf32>
    %109 = arith.mulf %108, %0 : vector<1x128xf32>
    %110 = vector.broadcast %106 : f32 to vector<1x128xf32>
    %111 = arith.addf %110, %109 : vector<1x128xf32>
    %c23 = arith.constant 23 : index
    %112 = memref.load %arg1[%c23] : memref<30xf32, #tpu.memory_space<smem>>
    %113 = vector.broadcast %112 : f32 to vector<1x128xf32>
    %114 = arith.mulf %113, %1 : vector<1x128xf32>
    %115 = arith.addf %111, %114 : vector<1x128xf32>
    %c25 = arith.constant 25 : index
    %116 = memref.load %arg1[%c25] : memref<30xf32, #tpu.memory_space<smem>>
    %117 = vector.broadcast %116 : f32 to vector<1x128xf32>
    %118 = arith.mulf %117, %2 : vector<1x128xf32>
    %119 = arith.addf %115, %118 : vector<1x128xf32>
    %c27 = arith.constant 27 : index
    %120 = memref.load %arg1[%c27] : memref<30xf32, #tpu.memory_space<smem>>
    %121 = vector.broadcast %120 : f32 to vector<1x128xf32>
    %122 = arith.mulf %121, %3 : vector<1x128xf32>
    %123 = arith.addf %119, %122 : vector<1x128xf32>
    %124 = arith.mulf %6, %123 : vector<1x128xf32>
    %125 = arith.addf %105, %124 : vector<1x128xf32>
    %c1_16 = arith.constant 1 : index
    %c0_17 = arith.constant 0 : index
    %126 = vector.load %arg4[%c1_16, %c0_17] : memref<2x128xf32, #tpu.memory_space<vmem>>, vector<1x128xf32>
    tpu.vector_store %arg4[%c1_16, %c0_17], %125 {strides = array<i32>} : memref<2x128xf32, #tpu.memory_space<vmem>>, vector<1x128xf32>,
    return
  }
  func.func @transform_0(%arg0: i32) -> i32 {
    %c0_i32 = arith.constant 0 : i32
    %c0_i32_0 = arith.constant 0 : i32
    return %c0_i32 : i32
  }
  func.func @transform_1(%arg0: i32) -> (i32, i32) {
    %c0_i32 = arith.constant 0 : i32
    %c0_i32_0 = arith.constant 0 : i32
    return %c0_i32, %arg0 : i32, i32
  }
  func.func @transform_2(%arg0: i32) -> (i32, i32) {
    %c0_i32 = arith.constant 0 : i32
    %c0_i32_0 = arith.constant 0 : i32
    return %c0_i32, %arg0 : i32, i32
  }
  func.func @transform_3(%arg0: i32) -> (i32, i32) {
    %c0_i32 = arith.constant 0 : i32
    %c0_i32_0 = arith.constant 0 : i32
    return %c0_i32, %arg0 : i32, i32
  }
}

</mosaic_0001>

<llo_original>
// kernel: tpu_custom_call.1
$region0: #{tpu_custom_call.1}
  #allocation0 [shape = 'u32[]', space=smem, size = 0x4, offset = 0x4, fixed_abs, tag = 'smem constant byte address 0x4 - core index']
  #allocation1 [shape = 'u32[144,128]{1,0:T(1,128)}', space=vmem, size = 0x12000, scoped, tag = 'internal scratch']
  %s0 = inlined_call_operand.hbm [shape: f32[30], index: 0, kind: input, shape index: {}]
  %s1 = inlined_call_operand.hbm [shape: f32[3,128], index: 1, kind: input, shape index: {}]
  %s2 = inlined_call_operand.vmem [shape: f32[4,128], index: 2, kind: input, shape index: {}]
  %s3 = inlined_call_operand.hbm [shape: f32[2,128], index: 3, kind: output, shape index: {}]
  %s4 = sld [smem:[#allocation0]]
  $region30: #{tpu_custom_call.1} parent=0
    _
  %s6 = ssub.s32 1, %s4
  %s7 = scalar_select 0, %s6, %s4
  $region1: #{tpu_custom_call.1} parent=0
    #allocation2 [shape = 'u8[512]{0}', space=smem, size = 0x200, scoped, tag = 'input window, operand 0, single buffered']
    #allocation3 [shape = 's32[1]{0}', space=sflag, size = 0x4, scoped, tag = 'scoped memory for tpu_custom_call.1']
    #allocation4 [shape = 's32[1]{0}', space=sflag, size = 0x4, scoped, tag = 'scoped memory for tpu_custom_call.1']
    #allocation5 [shape = 's32[1]{0}', space=sflag, size = 0x4, scoped, tag = 'scoped memory for tpu_custom_call.1']
    #allocation6 [shape = 'u8[2048]{0}', space=vmem, size = 0x800, scoped, tag = 'input window, operand 1, single buffered']
    #allocation7 [shape = 'u8[1024]{0}', space=vmem, size = 0x400, scoped, tag = 'output window, operand 0, single buffered']
    %8 = vsyncpa [#allocation5], 0
    %9 = vsyncpa [#allocation3], 0
    %10 = vsyncpa [#allocation4], 0
    // Predicated region
    $region2: #{tpu_custom_call.1} parent=1 // pred_check
      _
    $region3: #{tpu_custom_call.1} parent=1 // pred_check_branch
      %12 = sbr.rel (0) target = $region5
    $region4: #{tpu_custom_call.1} parent=1 // pred_region
      %s14 = ssub.s32 16, 16
      %15 = vsyncadd [#allocation5], %s14
      %18 = dma.hbm_to_smem %s0, 16, [#allocation2], [#allocation5]
    $region5: #{tpu_custom_call.1} parent=1 // pred_fallthru
      _
    // Predicated region
    $region6: #{tpu_custom_call.1} parent=1 // pred_check
      _
    $region7: #{tpu_custom_call.1} parent=1 // pred_check_branch
      %20 = sbr.rel (0) target = $region9
    $region8: #{tpu_custom_call.1} parent=1 // pred_region
      %s22 = ssub.s32 64, 64
      %23 = vsyncadd [#allocation3], %s22
      %s25 = sshll.u32 [#allocation6], 4
      %s26 = int_to_ptr.vmem [resolvable:$true] %s25
      %28 = dma.hbm_to_vmem [thread:$0]  %s1, 64, %s26, [#allocation3]
    $region9: #{tpu_custom_call.1} parent=1 // pred_fallthru
      _
    // Predicated region
    $region10: #{tpu_custom_call.1} parent=1 // pred_check
      _
    $region11: #{tpu_custom_call.1} parent=1 // pred_check_branch
      %30 = sbr.rel (0) target = $region13
    $region12: #{tpu_custom_call.1} parent=1 // pred_region
      _
    $region13: #{tpu_custom_call.1} parent=1 // pred_fallthru
      _
    // Predicated region
    $region14: #{tpu_custom_call.1} parent=1 // pred_check
      _
    $region15: #{tpu_custom_call.1} parent=1 // pred_check_branch
      %32 = sbr.rel (0) target = $region17
    $region16: #{tpu_custom_call.1} parent=1 // pred_region
      %33 = dma.done [#allocation5], 16
    $region17: #{tpu_custom_call.1} parent=1 // pred_fallthru
      _
    // Predicated region
    $region18: #{tpu_custom_call.1} parent=1 // pred_check
      _
    $region19: #{tpu_custom_call.1} parent=1 // pred_check_branch
      %35 = sbr.rel (0) target = $region21
    $region20: #{tpu_custom_call.1} parent=1 // pred_region
      %36 = dma.done [#allocation3], 64
    $region21: #{tpu_custom_call.1} parent=1 // pred_fallthru
      _
    %37 = sfence
    %v38 = vld [vmem:[%s2] sm:$0x1]
    %v39 = vld [vmem:[%s2 + $0x1] sm:$0x1]
    %v40 = vld [vmem:[%s2 + $0x2] sm:$0x1]
    %v41 = vld [vmem:[%s2 + $0x3] sm:$0x1]
    %v42 = vld [vmem:[#allocation6] sm:$0x1]
    %v43 = vld [vmem:[#allocation6 + $0x1] sm:$0x1]
    %v44 = vld [vmem:[#allocation6 + $0x2] sm:$0x1]
    %s45 = sld [smem:[#allocation2 + $0x8]]
    %s46 = sld [smem:[#allocation2]]
    %v47 = vstv %s46
    %v48 = vmul.f32 %v47, %v38
    %v49 = vstv %s45
    %v50 = vadd.f32 %v49, %v48
    %s51 = sld [smem:[#allocation2 + $0x2]]
    %v52 = vstv %s51
    %v53 = vmul.f32 %v52, %v39
    %v54 = vadd.f32 %v50, %v53
    %s55 = sld [smem:[#allocation2 + $0x4]]
    %v56 = vstv %s55
    %v57 = vmul.f32 %v56, %v40
    %v58 = vadd.f32 %v54, %v57
    %s59 = sld [smem:[#allocation2 + $0x6]]
    %v60 = vstv %s59
    %v61 = vmul.f32 %v60, %v41
    %v62 = vadd.f32 %v58, %v61
    %v63 = vmul.f32 %v42, %v62
    %s64 = sld [smem:[#allocation2 + $0x12]]
    %s65 = sld [smem:[#allocation2 + $0xa]]
    %v66 = vstv %s65
    %v67 = vmul.f32 %v66, %v38
    %v68 = vstv %s64
    %v69 = vadd.f32 %v68, %v67
    %s70 = sld [smem:[#allocation2 + $0xc]]
    %v71 = vstv %s70
    %v72 = vmul.f32 %v71, %v39
    %v73 = vadd.f32 %v69, %v72
    %s74 = sld [smem:[#allocation2 + $0xe]]
    %v75 = vstv %s74
    %v76 = vmul.f32 %v75, %v40
    %v77 = vadd.f32 %v73, %v76
    %s78 = sld [smem:[#allocation2 + $0x10]]
    %v79 = vstv %s78
    %v80 = vmul.f32 %v79, %v41
    %v81 = vadd.f32 %v77, %v80
    %v82 = vmul.f32 %v43, %v81
    %v83 = vadd.f32 %v63, %v82
    %s84 = sld [smem:[#allocation2 + $0x1c]]
    %s85 = sld [smem:[#allocation2 + $0x14]]
    %v86 = vstv %s85
    %v87 = vmul.f32 %v86, %v38
    %v88 = vstv %s84
    %v89 = vadd.f32 %v88, %v87
    %s90 = sld [smem:[#allocation2 + $0x16]]
    %v91 = vstv %s90
    %v92 = vmul.f32 %v91, %v39
    %v93 = vadd.f32 %v89, %v92
    %s94 = sld [smem:[#allocation2 + $0x18]]
    %v95 = vstv %s94
    %v96 = vmul.f32 %v95, %v40
    %v97 = vadd.f32 %v93, %v96
    %s98 = sld [smem:[#allocation2 + $0x1a]]
    %v99 = vstv %s98
    %v100 = vmul.f32 %v99, %v41
    %v101 = vadd.f32 %v97, %v100
    %v102 = vmul.f32 %v44, %v101
    %v103 = vadd.f32 %v83, %v102
    %104 = vst [vmem:[#allocation7] sm:$0x1] %v103
    %s105 = sld [smem:[#allocation2 + $0x9]]
    %s106 = sld [smem:[#allocation2 + $0x1]]
    %v107 = vstv %s106
    %v108 = vmul.f32 %v107, %v38
    %v109 = vstv %s105
    %v110 = vadd.f32 %v109, %v108
    %s111 = sld [smem:[#allocation2 + $0x3]]
    %v112 = vstv %s111
    %v113 = vmul.f32 %v112, %v39
    %v114 = vadd.f32 %v110, %v113
    %s115 = sld [smem:[#allocation2 + $0x5]]
    %v116 = vstv %s115
    %v117 = vmul.f32 %v116, %v40
    %v118 = vadd.f32 %v114, %v117
    %s119 = sld [smem:[#allocation2 + $0x7]]
    %v120 = vstv %s119
    %v121 = vmul.f32 %v120, %v41
    %v122 = vadd.f32 %v118, %v121
    %v123 = vmul.f32 %v42, %v122
    %s124 = sld [smem:[#allocation2 + $0x13]]
    %s125 = sld [smem:[#allocation2 + $0xb]]
    %v126 = vstv %s125
    %v127 = vmul.f32 %v126, %v38
    %v128 = vstv %s124
    %v129 = vadd.f32 %v128, %v127
    %s130 = sld [smem:[#allocation2 + $0xd]]
    %v131 = vstv %s130
    %v132 = vmul.f32 %v131, %v39
    %v133 = vadd.f32 %v129, %v132
    %s134 = sld [smem:[#allocation2 + $0xf]]
    %v135 = vstv %s134
    %v136 = vmul.f32 %v135, %v40
    %v137 = vadd.f32 %v133, %v136
    %s138 = sld [smem:[#allocation2 + $0x11]]
    %v139 = vstv %s138
    %v140 = vmul.f32 %v139, %v41
    %v141 = vadd.f32 %v137, %v140
    %v142 = vmul.f32 %v43, %v141
    %v143 = vadd.f32 %v123, %v142
    %s144 = sld [smem:[#allocation2 + $0x1d]]
    %s145 = sld [smem:[#allocation2 + $0x15]]
    %v146 = vstv %s145
    %v147 = vmul.f32 %v146, %v38
    %v148 = vstv %s144
    %v149 = vadd.f32 %v148, %v147
    %s150 = sld [smem:[#allocation2 + $0x17]]
    %v151 = vstv %s150
    %v152 = vmul.f32 %v151, %v39
    %v153 = vadd.f32 %v149, %v152
    %s154 = sld [smem:[#allocation2 + $0x19]]
    %v155 = vstv %s154
    %v156 = vmul.f32 %v155, %v40
    %v157 = vadd.f32 %v153, %v156
    %s158 = sld [smem:[#allocation2 + $0x1b]]
    %v159 = vstv %s158
    %v160 = vmul.f32 %v159, %v41
    %v161 = vadd.f32 %v157, %v160
    %v162 = vmul.f32 %v44, %v161
    %v163 = vadd.f32 %v143, %v162
    %164 = vst [vmem:[#allocation7 + $0x1] sm:$0x1] %v163
    // Predicated region
    $region22: #{tpu_custom_call.1} parent=1 // pred_check
      _
    $region23: #{tpu_custom_call.1} parent=1 // pred_check_branch
      %166 = sbr.rel (0) target = $region25
    $region24: #{tpu_custom_call.1} parent=1 // pred_region
      %s168 = ssub.s32 32, 32
      %169 = vsyncadd [#allocation4], %s168
      %s171 = sshll.u32 [#allocation7], 4
      %s172 = int_to_ptr.vmem [resolvable:$true] %s171
      %174 = dma.vmem_to_hbm [thread:$0]  %s172, 32, %s3, [#allocation4]
    $region25: #{tpu_custom_call.1} parent=1 // pred_fallthru
      _
    // Predicated region
    $region26: #{tpu_custom_call.1} parent=1 // pred_check
      _
    $region27: #{tpu_custom_call.1} parent=1 // pred_check_branch
      %176 = sbr.rel (0) target = $region29
    $region28: #{tpu_custom_call.1} parent=1 // pred_region
      %177 = dma.done [#allocation4], 32
    $region29: #{tpu_custom_call.1} parent=1 // pred_fallthru
      _
    %178 = vsyncpa [#allocation3], 1
    %179 = vsyncpa [#allocation4], 1
    %180 = vsyncpa [#allocation5], 1

</llo_original>
